<compile_context>
chip_gen: v5e
topology: v5e:2x2
jax: 0.10.0
libtpu: 0.0.40
codegen_flags: <defaults>
</compile_context>

<pallas_src>
import functools

import jax
import jax.numpy as jnp
from jax.experimental import pallas as pl
from jax.experimental.pallas import tpu as pltpu


def _round_up(x: int, m: int) -> int:
    return ((x + m - 1) // m) * m


def _best_tile(padded: int, target: int, unit: int) -> int:
    """Largest divisor of `padded` that is <= target and a multiple of `unit`.

    `padded` is always a multiple of `unit`, so `unit` itself is a valid
    fallback. Loop length is at most target/unit (tiny).
    """
    best = unit
    d = unit
    limit = min(padded, max(target, unit))
    while d <= limit:
        if padded % d == 0:
            best = d
        d += unit
    return best


# --------------------------------------------------------------------------
# Kernels
# --------------------------------------------------------------------------
def _liquid_kernel_single_k(x_ref, w_ref, b_ref, o_ref):
    # x_ref: (tm, Ip)  w_ref: (Ip, tn)  b_ref: (1, tn)  o_ref: (tm, tn)
    y = jnp.dot(x_ref[...], w_ref[...], preferred_element_type=jnp.float32)
    y = y + b_ref[...].astype(jnp.float32)
    o_ref[...] = jnp.tanh(y).astype(o_ref.dtype)


def _liquid_kernel_multi_k_f32(x_ref, w_ref, b_ref, o_ref):
    # f32 output: accumulate directly into o_ref (resident across the K axis;
    # its index_map ignores k), so no VMEM scratch is needed.
    k = pl.program_id(2)

    @pl.when(k == 0)
    def _():
        o_ref[...] = jnp.zeros_like(o_ref)

    o_ref[...] += jnp.dot(
        x_ref[...], w_ref[...], preferred_element_type=jnp.float32
    )

    @pl.when(k == pl.num_programs(2) - 1)
    def _():
        o_ref[...] = jnp.tanh(o_ref[...] + b_ref[...])


def _liquid_kernel_multi_k_acc(x_ref, w_ref, b_ref, o_ref, acc_ref):
    # Low-precision output: keep a resident f32 accumulator scratch.
    k = pl.program_id(2)

    @pl.when(k == 0)
    def _():
        acc_ref[...] = jnp.zeros_like(acc_ref)

    acc_ref[...] += jnp.dot(
        x_ref[...], w_ref[...], preferred_element_type=jnp.float32
    )

    @pl.when(k == pl.num_programs(2) - 1)
    def _():
        y = acc_ref[...] + b_ref[...].astype(jnp.float32)
        o_ref[...] = jnp.tanh(y).astype(o_ref.dtype)


# --------------------------------------------------------------------------
# One-time parameter relayout (hoisted out of the per-call hot path)
# --------------------------------------------------------------------------
def prepare_liquid_params(weight, bias, use_bf16: bool = False):
    """(O, I) PyTorch nn.Linear weight -> lane-dense, zero-padded (Ip, Op).

    Do this once at parameter-load time. Zero padding keeps the dot exact.
    Bias is stored in f32 (it is added on the f32 accumulator).
    """
    O, I = weight.shape
    Ip = _round_up(I, 128)
    Op = _round_up(O, 128)
    w_t = weight.T
    if use_bf16:
        w_t = w_t.astype(jnp.bfloat16)
    w_p = jnp.pad(w_t, ((0, Ip - I), (0, Op - O)))
    b_p = jnp.pad(bias.astype(jnp.float32), (0, Op - O)).reshape(1, Op)
    return w_p, b_p


# --------------------------------------------------------------------------
# Forward wrapper
# --------------------------------------------------------------------------
@functools.partial(
    jax.jit,
    static_argnames=("output_size", "use_bf16", "tm_target", "tn_target", "tk_target"),
)
def liquid_layer(
    x,
    w_p,
    b_p,
    *,
    output_size,
    use_bf16: bool = False,
    tm_target: int = 512,
    tn_target: int = 512,
    tk_target: int = 1024,
):
    """tanh(x @ W^T + b) with W given pre-transposed/padded by prepare_liquid_params.

    x:   (batch, input_size)
    w_p: (Ip, Op)  pre-transposed, zero-padded weight
    b_p: (1, Op)   zero-padded f32 bias
    returns (batch, output_size)
    """
    B, I = x.shape
    Ip, Op = w_p.shape
    out_dtype = x.dtype

    # Sublane rounding is dtype-aware: bf16 packs 16 rows per vreg.
    sub = 16 if (use_bf16 or x.dtype == jnp.bfloat16) else 8
    Bp = _round_up(B, sub)

    x_in = x.astype(jnp.bfloat16) if use_bf16 else x
    x_p = jnp.pad(x_in, ((0, Bp - B), (0, Ip - I)))

    # Divisor-aware tile selection against the already-rounded dims.
    tm = _best_tile(Bp, tm_target, sub)
    tn = _best_tile(Op, tn_target, 128)
    single_k = Ip <= 2048  # fast path: one K tile, no accumulator loop
    tk = Ip if single_k else _best_tile(Ip, tk_target, 128)

    # v7x megacore: try to guarantee >= 2 tiles on the parallel (i, j) axes so
    # the second TensorCore isn't idle. Only split when it stays aligned.
    if (Bp // tm) * (Op // tn) == 1:
        if tn >= 256 and tn % 256 == 0:
            tn //= 2
        elif tm >= 2 * sub and tm % (2 * sub) == 0:
            tm //= 2

    bytes_accessed = (
        x_p.size * x_p.dtype.itemsize
        + w_p.size * w_p.dtype.itemsize
        + b_p.size * b_p.dtype.itemsize
        + Bp * Op * x.dtype.itemsize
    )
    cost = pl.CostEstimate(
        flops=2 * Bp * Ip * Op,
        transcendentals=Bp * Op,
        bytes_accessed=bytes_accessed,
    )

    if single_k:
        out_padded = pl.pallas_call(
            _liquid_kernel_single_k,
            out_shape=jax.ShapeDtypeStruct((Bp, Op), out_dtype),
            grid_spec=pltpu.PrefetchScalarGridSpec(
                num_scalar_prefetch=0,
                grid=(Bp // tm, Op // tn),
                in_specs=[
                    pl.BlockSpec((tm, tk), lambda i, j: (i, 0)),  # x tile
                    pl.BlockSpec((tk, tn), lambda i, j: (0, j)),  # w tile
                    pl.BlockSpec((1, tn), lambda i, j: (0, j)),   # bias tile
                ],
                out_specs=pl.BlockSpec((tm, tn), lambda i, j: (i, j)),
            ),
            compiler_params=pltpu.CompilerParams(
                dimension_semantics=("parallel", "parallel"),
                vmem_limit_bytes=48 * 1024 * 1024,
            ),
            cost_estimate=cost,
        )(x_p, w_p, b_p)
    else:
        f32_out = out_dtype == jnp.float32
        kernel = _liquid_kernel_multi_k_f32 if f32_out else _liquid_kernel_multi_k_acc
        scratch = [] if f32_out else [pltpu.VMEM((tm, tn), jnp.float32)]
        out_padded = pl.pallas_call(
            kernel,
            out_shape=jax.ShapeDtypeStruct((Bp, Op), out_dtype),
            grid_spec=pltpu.PrefetchScalarGridSpec(
                num_scalar_prefetch=0,
                grid=(Bp // tm, Op // tn, Ip // tk),
                in_specs=[
                    pl.BlockSpec((tm, tk), lambda i, j, k: (i, k)),  # x tile
                    pl.BlockSpec((tk, tn), lambda i, j, k: (k, j)),  # w tile
                    pl.BlockSpec((1, tn), lambda i, j, k: (0, j)),   # bias tile
                ],
                out_specs=pl.BlockSpec((tm, tn), lambda i, j, k: (i, j)),
                scratch_shapes=scratch,
            ),
            compiler_params=pltpu.CompilerParams(
                dimension_semantics=("parallel", "parallel", "arbitrary"),
                vmem_limit_bytes=48 * 1024 * 1024,
            ),
            cost_estimate=cost,
        )(x_p, w_p, b_p)

    return out_padded[:B, :output_size]


if __name__ == "__main__":
    seq_length = 5          # input_size in the reference module
    input_size = seq_length
    output_size = 1
    batch = 8

    key = jax.random.PRNGKey(0)
    kx, kw, kb = jax.random.split(key, 3)

    # Deterministic "randn"-style parameters (synthetic; no checkpoint load).
    x = jax.random.normal(kx, (batch, input_size), dtype=jnp.float32)
    weight = jax.random.normal(kw, (output_size, input_size), dtype=jnp.float32)
    bias = jax.random.normal(kb, (output_size,), dtype=jnp.float32)

    # One-time parameter relayout (hoisted out of the per-call path).
    w_p, b_p = prepare_liquid_params(weight, bias)

    out = liquid_layer(x, w_p, b_p, output_size=output_size)
    out = jax.block_until_ready(out)

    # Reference check in plain JAX.
    ref = jnp.tanh(x @ weight.T + bias[None, :])
    assert out.shape == (batch, output_size)
    assert jnp.allclose(out, ref, atol=1e-5, rtol=1e-5)

    print("KERNEL_OK")
</pallas_src>

<mosaic_0001>
module attributes {stable_mosaic.version = 11 : i64} {
  func.func @_liquid_kernel_single_k(%arg0: i32, %arg1: i32, %arg2: memref<8x128xf32, #tpu.memory_space<vmem>>, %arg3: memref<128x128xf32, #tpu.memory_space<vmem>>, %arg4: memref<1x128xf32, #tpu.memory_space<vmem>>, %arg5: memref<8x128xf32, #tpu.memory_space<vmem>>) attributes {dimension_semantics = [#tpu.dimension_semantics<parallel>, #tpu.dimension_semantics<parallel>], iteration_bounds = array<i64: 1, 1>, scalar_prefetch = 0 : i64, scratch_operands = 0 : i64, tpu.core_type = #tpu.core_type<tc>, window_params = [{transform_indices = @transform_0, window_bounds = array<i64: 8, 128>}, {transform_indices = @transform_1, window_bounds = array<i64: 128, 128>}, {transform_indices = @transform_2, window_bounds = array<i64: 1, 128>}, {transform_indices = @transform_3, window_bounds = array<i64: 8, 128>}]} {
    %c0 = arith.constant 0 : index
    %c0_0 = arith.constant 0 : index
    %0 = vector.load %arg2[%c0, %c0_0] : memref<8x128xf32, #tpu.memory_space<vmem>>, vector<8x128xf32>
    %c0_1 = arith.constant 0 : index
    %c0_2 = arith.constant 0 : index
    %1 = vector.load %arg3[%c0_1, %c0_2] : memref<128x128xf32, #tpu.memory_space<vmem>>, vector<128x128xf32>
    %cst = arith.constant dense<0.000000e+00> : vector<8x128xf32>
    %2 = tpu.matmul %0, %1, %cst {dimension_numbers = #tpu.dot_dimension_numbers<[1], [0], [0], [1], [0, 0, 1, 1], [], []>} : vector<8x128xf32>, vector<128x128xf32>, vector<8x128xf32> -> vector<8x128xf32>
    %c0_3 = arith.constant 0 : index
    %c0_4 = arith.constant 0 : index
    %3 = vector.load %arg4[%c0_3, %c0_4] : memref<1x128xf32, #tpu.memory_space<vmem>>, vector<1x128xf32>
    %4 = vector.broadcast %3 : vector<1x128xf32> to vector<8x128xf32>
    %5 = arith.addf %2, %4 : vector<8x128xf32>
    %6 = math.tanh %5 : vector<8x128xf32>
    %c0_5 = arith.constant 0 : index
    %c0_6 = arith.constant 0 : index
    %7 = vector.load %arg5[%c0_5, %c0_6] : memref<8x128xf32, #tpu.memory_space<vmem>>, vector<8x128xf32>
    tpu.vector_store %arg5[%c0_5, %c0_6], %6 {strides = array<i32>} : memref<8x128xf32, #tpu.memory_space<vmem>>, vector<8x128xf32>,
    return
  }
  func.func @transform_0(%arg0: i32, %arg1: i32) -> (i32, i32) {
    %c0_i32 = arith.constant 0 : i32
    %c0_i32_0 = arith.constant 0 : i32
    return %arg0, %c0_i32 : i32, i32
  }
  func.func @transform_1(%arg0: i32, %arg1: i32) -> (i32, i32) {
    %c0_i32 = arith.constant 0 : i32
    %c0_i32_0 = arith.constant 0 : i32
    return %c0_i32, %arg1 : i32, i32
  }
  func.func @transform_2(%arg0: i32, %arg1: i32) -> (i32, i32) {
    %c0_i32 = arith.constant 0 : i32
    %c0_i32_0 = arith.constant 0 : i32
    return %c0_i32, %arg1 : i32, i32
  }
  func.func @transform_3(%arg0: i32, %arg1: i32) -> (i32, i32) {
    %c0_i32 = arith.constant 0 : i32
    return %arg0, %arg1 : i32, i32
  }
}

</mosaic_0001>

<llo_original>
// kernel: liquid_layer.1
$region0: #{liquid_layer.1}
  #allocation0 [shape = 'u32[]', space=smem, size = 0x4, offset = 0x4, fixed_abs, tag = 'smem constant byte address 0x4 - core index']
  #allocation1 [shape = 'u32[72,128]{1,0:T(1,128)}', space=vmem, size = 0x9000, scoped, tag = 'internal scratch']
  %s0 = inlined_call_operand.vmem [shape: f32[8,128], index: 0, kind: input, shape index: {}]
  %s1 = inlined_call_operand.hbm [shape: f32[128,128], index: 1, kind: input, shape index: {}]
  %s2 = inlined_call_operand.vmem [shape: f32[1,128], index: 2, kind: input, shape index: {}]
  %s3 = inlined_call_operand.vmem [shape: f32[8,128], index: 3, kind: output, shape index: {}]
  %s4 = sld [smem:[#allocation0]]
  $region26: #{liquid_layer.1} parent=0
    _
  %s6 = ssub.s32 1, %s4
  %s7 = scalar_select 0, %s6, %s4
  $region1: #{liquid_layer.1} parent=0
    #allocation2 [shape = 'u8[65536]{0}', space=vmem, size = 0x10000, scoped, tag = 'input window, operand 1, single buffered']
    #allocation3 [shape = 's32[1]{0}', space=sflag, size = 0x4, scoped, tag = 'scoped memory for liquid_layer.1']
    %8 = vsyncpa [#allocation3], 0
    // Predicated region
    $region2: #{liquid_layer.1} parent=1 // pred_check
      _
    $region3: #{liquid_layer.1} parent=1 // pred_check_branch
      %10 = sbr.rel (0) target = $region5
    $region4: #{liquid_layer.1} parent=1 // pred_region
      _
    $region5: #{liquid_layer.1} parent=1 // pred_fallthru
      _
    // Predicated region
    $region6: #{liquid_layer.1} parent=1 // pred_check
      _
    $region7: #{liquid_layer.1} parent=1 // pred_check_branch
      %12 = sbr.rel (0) target = $region9
    $region8: #{liquid_layer.1} parent=1 // pred_region
      %14 = vsyncadd [#allocation3], 0
      %s15 = sshll.u32 %s1, 4
      %s16 = int_to_ptr.hbm [resolvable:$true] %s15
      %s17 = sshll.u32 [#allocation2], 4
      %s18 = int_to_ptr.vmem [resolvable:$true] %s17
      %23 = dma.hbm_to_vmem [thread:$0]  %s16, 2048, %s18, [#allocation3], 128, 128, 8
    $region9: #{liquid_layer.1} parent=1 // pred_fallthru
      _
    // Predicated region
    $region10: #{liquid_layer.1} parent=1 // pred_check
      _
    $region11: #{liquid_layer.1} parent=1 // pred_check_branch
      %25 = sbr.rel (0) target = $region13
    $region12: #{liquid_layer.1} parent=1 // pred_region
      _
    $region13: #{liquid_layer.1} parent=1 // pred_fallthru
      _
    // Predicated region
    $region14: #{liquid_layer.1} parent=1 // pred_check
      _
    $region15: #{liquid_layer.1} parent=1 // pred_check_branch
      %27 = sbr.rel (0) target = $region17
    $region16: #{liquid_layer.1} parent=1 // pred_region
      %29 = dma.done [#allocation3], 2048
    $region17: #{liquid_layer.1} parent=1 // pred_fallthru
      _
    %v30 = vld [vmem:[%s0] sm:$0xff]
    %v31 = vld [vmem:[#allocation2] sm:$0xff]
    %v32 = vld [vmem:[#allocation2 + $0x8] sm:$0xff]
    %v33 = vld [vmem:[#allocation2 + $0x10] sm:$0xff]
    %v34 = vld [vmem:[#allocation2 + $0x18] sm:$0xff]
    %v35 = vld [vmem:[#allocation2 + $0x20] sm:$0xff]
    %v36 = vld [vmem:[#allocation2 + $0x28] sm:$0xff]
    %v37 = vld [vmem:[#allocation2 + $0x30] sm:$0xff]
    %v38 = vld [vmem:[#allocation2 + $0x38] sm:$0xff]
    %v39 = vld [vmem:[#allocation2 + $0x40] sm:$0xff]
    %v40 = vld [vmem:[#allocation2 + $0x48] sm:$0xff]
    %v41 = vld [vmem:[#allocation2 + $0x50] sm:$0xff]
    %v42 = vld [vmem:[#allocation2 + $0x58] sm:$0xff]
    %v43 = vld [vmem:[#allocation2 + $0x60] sm:$0xff]
    %v44 = vld [vmem:[#allocation2 + $0x68] sm:$0xff]
    %v45 = vld [vmem:[#allocation2 + $0x70] sm:$0xff]
    %v46 = vld [vmem:[#allocation2 + $0x78] sm:$0xff]
    %v47 = vld [vmem:[%s2] sm:$0x1]
    %v49 = vperm.slane %v47, 0
    %51 = vmatpush.msra.mxu0 %v46
    %52 = vmatpush.msra.mxu0 %v45
    %53 = vmatpush.msra.mxu0 %v44
    %54 = vmatpush.msra.mxu0 %v43
    %55 = vmatpush.msra.mxu0 %v42
    %56 = vmatpush.msra.mxu0 %v41
    %57 = vmatpush.msra.mxu0 %v40
    %58 = vmatpush.msra.mxu0 %v39
    %59 = vmatpush.msra.mxu0 %v38
    %60 = vmatpush.msra.mxu0 %v37
    %61 = vmatpush.msra.mxu0 %v36
    %62 = vmatpush.msra.mxu0 %v35
    %63 = vmatpush.msra.mxu0 %v34
    %64 = vmatpush.msra.mxu0 %v33
    %65 = vmatpush.msra.mxu0 %v32
    %66 = vmatpush.msra.mxu0 %v31
    %67 = vmatmul.f32.gmra.mxu0 %v30
    %v68 = vpop.f32.mrf.mxu0
    %v69 = vadd.f32 %v49, %v68
    %70 = vdwg.mxu0
    %v71 = vtanh.pop %v69
    %72 = vst [vmem:[%s3] sm:$0xff] %v71
    // Predicated region
    $region18: #{liquid_layer.1} parent=1 // pred_check
      _
    $region19: #{liquid_layer.1} parent=1 // pred_check_branch
      %74 = sbr.rel (0) target = $region21
    $region20: #{liquid_layer.1} parent=1 // pred_region
      _
    $region21: #{liquid_layer.1} parent=1 // pred_fallthru
      _
    // Predicated region
    $region22: #{liquid_layer.1} parent=1 // pred_check
      _
    $region23: #{liquid_layer.1} parent=1 // pred_check_branch
      %76 = sbr.rel (0) target = $region25
    $region24: #{liquid_layer.1} parent=1 // pred_region
      _
    $region25: #{liquid_layer.1} parent=1 // pred_fallthru
      _
    %77 = vsyncpa [#allocation3], 1

</llo_original>
